<compile_context>
chip_gen: v7x
topology: tpu7x:2x2x1
jax: 0.10.0
libtpu: 0.0.40
codegen_flags: <defaults>
</compile_context>

<pallas_src>
import functools

import jax
import jax.numpy as jnp
from jax import lax
from jax.experimental import pallas as pl
from jax.experimental.pallas import tpu as pltpu


def _patch_proj_kernel(x_ref, w_ref, b_ref, o_ref):
    # x_ref: (tm, K)  tile of flattened patches
    # w_ref: (K, D)   full projection weight, resident in VMEM
    # b_ref: (1, D)   bias
    # o_ref: (tm, D)  output tile
    acc = jnp.dot(x_ref[...], w_ref[...], preferred_element_type=jnp.float32)
    acc = acc + b_ref[...].astype(jnp.float32)
    o_ref[...] = acc.astype(o_ref.dtype)


def _round_up(n, m):
    return ((n + m - 1) // m) * m


def _choose_tm(M, K, D, x_itemsize, w_itemsize, tm_max, budget_bytes):
    """Largest row tile whose double-buffered x/out tiles + resident weight fit."""
    fixed = 2 * (K * D + D) * w_itemsize + (4 << 20)  # weight/bias (2 bufs) + headroom
    tm_cap = min(tm_max, max(8, _round_up(M, 8)))
    candidates = [tm_cap] + [t for t in (512, 256, 128, 64, 32, 16, 8) if t < tm_cap]
    for tm in candidates:
        need = fixed + 2 * tm * (K + D) * x_itemsize
        if need <= budget_bytes:
            return tm, need
    tm = 8
    return tm, fixed + 2 * tm * (K + D) * x_itemsize


@functools.partial(jax.jit, static_argnames=("patch_size", "tm_max"))
def patch_embed(x, w_conv, bias, *, patch_size, tm_max=1024):
    """ViT PatchEmbed forward.

    x:      (B, C, H, W)
    w_conv: (embed_dim, C, P, P)   PyTorch Conv2d weight layout
    bias:   (embed_dim,)
    returns (B, num_patches, embed_dim)
    """
    B, C, H, W = x.shape
    P = patch_size
    assert H % P == 0 and W % P == 0, "image size must be divisible by patch size"
    Hp, Wp = H // P, W // P
    num_patches = Hp * Wp
    D = w_conv.shape[0]
    K = C * P * P

    # im2col: (B, C, H, W) -> (M, K); each patch flattened in (C, P, P) order so
    # it matches w_conv.reshape(D, C*P*P).  Pure layout plumbing, one HBM pass.
    patches = x.reshape(B, C, Hp, P, Wp, P)
    patches = patches.transpose(0, 2, 4, 1, 3, 5)        # (B, Hp, Wp, C, P, P)
    patches = patches.reshape(B * num_patches, K)

    # Conv weight -> (K, D) so the kernel computes plain patches @ W.
    w2 = w_conv.reshape(D, K).T
    b2 = bias.reshape(1, D)

    # Lane-dense feature dims: zero-pad K / D up to multiples of 128 if needed
    # (no-op for standard ViT configs).  Zero columns don't change the result.
    K_pad = _round_up(K, 128)
    D_pad = _round_up(D, 128)
    if K_pad != K:
        patches = jnp.pad(patches, ((0, 0), (0, K_pad - K)))
        w2 = jnp.pad(w2, ((0, K_pad - K), (0, 0)))
    if D_pad != D:
        w2 = jnp.pad(w2, ((0, 0), (0, D_pad - D)))
        b2 = jnp.pad(b2, ((0, 0), (0, D_pad - D)))

    x_bytes = jnp.dtype(x.dtype).itemsize
    w_bytes = jnp.dtype(w_conv.dtype).itemsize

    # Row tiling: big tiles for MXU utilization / fewer grid steps, padded M for
    # ragged token counts (sliced off afterwards).
    M = B * num_patches
    tm_eff, vmem_needed = _choose_tm(M, K_pad, D_pad, x_bytes, w_bytes,
                                     tm_max, budget_bytes=30 << 20)
    M_pad = _round_up(M, tm_eff)
    if M_pad != M:
        patches = jnp.pad(patches, ((0, M_pad - M), (0, 0)))
    grid = M_pad // tm_eff

    vmem_limit = int(min(max(vmem_needed, 16 << 20), 48 << 20))

    cost = pl.CostEstimate(
        flops=2 * M_pad * K_pad * D_pad,
        transcendentals=0,
        bytes_accessed=(M_pad * (K_pad + D_pad)) * x_bytes
                       + (K_pad * D_pad + D_pad) * w_bytes,
    )

    out = pl.pallas_call(
        _patch_proj_kernel,
        out_shape=jax.ShapeDtypeStruct((M_pad, D_pad), x.dtype),
        grid_spec=pltpu.PrefetchScalarGridSpec(
            num_scalar_prefetch=0,
            grid=(grid,),
            in_specs=[
                pl.BlockSpec((tm_eff, K_pad), lambda i: (i, 0)),   # patch tile
                pl.BlockSpec((K_pad, D_pad), lambda i: (0, 0)),    # resident weight
                pl.BlockSpec((1, D_pad), lambda i: (0, 0)),        # bias
            ],
            out_specs=pl.BlockSpec((tm_eff, D_pad), lambda i: (i, 0)),
        ),
        compiler_params=pltpu.CompilerParams(
            dimension_semantics=("parallel",),
            vmem_limit_bytes=vmem_limit,
        ),
        cost_estimate=cost,
    )(patches, w2, b2)

    if M_pad != M:
        out = out[:M]
    if D_pad != D:
        out = out[:, :D]
    # norm_layer=None in the reference module -> nn.Identity -> no-op.
    return out.reshape(B, num_patches, D)


def _reference(x, w_conv, bias, patch_size):
    """Independent reference: the actual strided conv + flatten + transpose."""
    y = lax.conv_general_dilated(
        x, w_conv, window_strides=(patch_size, patch_size), padding="VALID",
        dimension_numbers=("NCHW", "OIHW", "NCHW"))
    Bn, D, Hp, Wp = y.shape
    y = y + bias.reshape(1, D, 1, 1)
    return y.reshape(Bn, D, Hp * Wp).transpose(0, 2, 1)


if __name__ == "__main__":
    key = jax.random.PRNGKey(0)
    k_x, k_w, k_b = jax.random.split(key, 3)

    # Small shapes consistent with the module: 16x16 image, 4 channels,
    # patch 8 -> 4 patches/img, embed_dim 128 (lane-dense last dim).
    B, C, H, W = 2, 4, 16, 16
    patch_size = 8
    embed_dim = 128

    fan_in = C * patch_size * patch_size
    bound = 1.0 / (fan_in ** 0.5)   # PyTorch Conv2d default init range
    x = jax.random.normal(k_x, (B, C, H, W), jnp.float32)
    w_conv = jax.random.uniform(k_w, (embed_dim, C, patch_size, patch_size),
                                jnp.float32, -bound, bound)
    bias = jax.random.uniform(k_b, (embed_dim,), jnp.float32, -bound, bound)

    out = patch_embed(x, w_conv, bias, patch_size=patch_size)
    out = jax.block_until_ready(out)

    ref = _reference(x, w_conv, bias, patch_size)
    num_patches = (H // patch_size) * (W // patch_size)
    assert out.shape == (B, num_patches, embed_dim)
    assert jnp.allclose(out, ref, atol=1e-4, rtol=1e-4)

    print("KERNEL_OK")
</pallas_src>

<mosaic_0001>
module attributes {stable_mosaic.version = 11 : i64} {
  func.func @_patch_proj_kernel(%arg0: i32, %arg1: memref<8x256xf32, #tpu.memory_space<vmem>>, %arg2: memref<256x128xf32, #tpu.memory_space<vmem>>, %arg3: memref<1x128xf32, #tpu.memory_space<vmem>>, %arg4: memref<8x128xf32, #tpu.memory_space<vmem>>) attributes {dimension_semantics = [#tpu.dimension_semantics<parallel>], iteration_bounds = array<i64: 1>, scalar_prefetch = 0 : i64, scratch_operands = 0 : i64, tpu.core_type = #tpu.core_type<tc>, window_params = [{transform_indices = @transform_0, window_bounds = array<i64: 8, 256>}, {pipeline_mode = #tpu.pipeline_mode<synchronous>, transform_indices = @transform_1, window_bounds = array<i64: 256, 128>}, {pipeline_mode = #tpu.pipeline_mode<synchronous>, transform_indices = @transform_2, window_bounds = array<i64: 1, 128>}, {transform_indices = @transform_3, window_bounds = array<i64: 8, 128>}]} {
    %c0 = arith.constant 0 : index
    %c0_0 = arith.constant 0 : index
    %0 = vector.load %arg1[%c0, %c0_0] : memref<8x256xf32, #tpu.memory_space<vmem>>, vector<8x256xf32>
    %c0_1 = arith.constant 0 : index
    %c0_2 = arith.constant 0 : index
    %1 = vector.load %arg2[%c0_1, %c0_2] : memref<256x128xf32, #tpu.memory_space<vmem>>, vector<256x128xf32>
    %cst = arith.constant dense<0.000000e+00> : vector<8x128xf32>
    %2 = tpu.matmul %0, %1, %cst {dimension_numbers = #tpu.dot_dimension_numbers<[1], [0], [0], [1], [0, 0, 1, 1], [], []>} : vector<8x256xf32>, vector<256x128xf32>, vector<8x128xf32> -> vector<8x128xf32>
    %c0_3 = arith.constant 0 : index
    %c0_4 = arith.constant 0 : index
    %3 = vector.load %arg3[%c0_3, %c0_4] : memref<1x128xf32, #tpu.memory_space<vmem>>, vector<1x128xf32>
    %4 = vector.broadcast %3 : vector<1x128xf32> to vector<8x128xf32>
    %5 = arith.addf %2, %4 : vector<8x128xf32>
    %c0_5 = arith.constant 0 : index
    %c0_6 = arith.constant 0 : index
    %6 = vector.load %arg4[%c0_5, %c0_6] : memref<8x128xf32, #tpu.memory_space<vmem>>, vector<8x128xf32>
    tpu.vector_store %arg4[%c0_5, %c0_6], %5 {strides = array<i32>} : memref<8x128xf32, #tpu.memory_space<vmem>>, vector<8x128xf32>,
    return
  }
  func.func @transform_0(%arg0: i32) -> (i32, i32) {
    %c0_i32 = arith.constant 0 : i32
    %c0_i32_0 = arith.constant 0 : i32
    return %arg0, %c0_i32 : i32, i32
  }
  func.func @transform_1(%arg0: i32) -> (i32, i32) {
    %c0_i32 = arith.constant 0 : i32
    %c0_i32_0 = arith.constant 0 : i32
    %c0_i32_1 = arith.constant 0 : i32
    return %c0_i32, %c0_i32_0 : i32, i32
  }
  func.func @transform_2(%arg0: i32) -> (i32, i32) {
    %c0_i32 = arith.constant 0 : i32
    %c0_i32_0 = arith.constant 0 : i32
    %c0_i32_1 = arith.constant 0 : i32
    return %c0_i32, %c0_i32_0 : i32, i32
  }
  func.func @transform_3(%arg0: i32) -> (i32, i32) {
    %c0_i32 = arith.constant 0 : i32
    %c0_i32_0 = arith.constant 0 : i32
    return %arg0, %c0_i32 : i32, i32
  }
}

</mosaic_0001>

<llo_original>
// kernel: patch_embed.1
$region0: #{patch_embed.1}
  #allocation0 [shape = 'u32[]', space=smem, size = 0x4, offset = 0x4, fixed_abs, tag = 'smem constant byte address 0x4 - core index']
  #allocation1 [shape = 'u32[144,128]{1,0:T(1,128)}', space=vmem, size = 0x12000, scoped, tag = 'internal scratch']
  %s0 = inlined_call_operand.vmem [shape: f32[8,256], index: 0, kind: input, shape index: {}]
  %s1 = inlined_call_operand.vmem [shape: f32[256,128], index: 1, kind: input, shape index: {}]
  %s2 = inlined_call_operand.vmem [shape: f32[1,128], index: 2, kind: input, shape index: {}]
  %s3 = inlined_call_operand.hbm [shape: f32[8,128], index: 3, kind: output, shape index: {}]
  %s4 = sld [smem:[#allocation0]]
  $region22: #{patch_embed.1} parent=0
    _
  %s6 = ssub.s32 1, %s4
  %s7 = scalar_select 0, %s6, %s4
  $region1: #{patch_embed.1} parent=0
    #allocation2 [shape = 'u8[4096]{0}', space=vmem, size = 0x1000, scoped, tag = 'output window, operand 0, single buffered']
    #allocation3 [shape = 's32[1]{0}', space=sflag, size = 0x4, scoped, tag = 'scoped memory for patch_embed.1']
    %8 = vsyncpa [#allocation3], 0
    // Predicated region
    $region2: #{patch_embed.1} parent=1 // pred_check
      _
    $region3: #{patch_embed.1} parent=1 // pred_check_branch
      %10 = sbr.rel (0) target = $region5
    $region4: #{patch_embed.1} parent=1 // pred_region
      _
    $region5: #{patch_embed.1} parent=1 // pred_fallthru
      _
    // Predicated region
    $region6: #{patch_embed.1} parent=1 // pred_check
      _
    $region7: #{patch_embed.1} parent=1 // pred_check_branch
      %12 = sbr.rel (0) target = $region9
    $region8: #{patch_embed.1} parent=1 // pred_region
      _
    $region9: #{patch_embed.1} parent=1 // pred_fallthru
      _
    // Predicated region
    $region10: #{patch_embed.1} parent=1 // pred_check
      _
    $region11: #{patch_embed.1} parent=1 // pred_check_branch
      %14 = sbr.rel (0) target = $region13
    $region12: #{patch_embed.1} parent=1 // pred_region
      _
    $region13: #{patch_embed.1} parent=1 // pred_fallthru
      _
    %v15 = vld [vmem:[%s0] sm:$0xff]
    %v16 = vld [vmem:[%s0 + $0x8] sm:$0xff]
    %v17 = vld [vmem:[%s1] sm:$0xff]
    %v18 = vld [vmem:[%s1 + $0x8] sm:$0xff]
    %v19 = vld [vmem:[%s1 + $0x10] sm:$0xff]
    %v20 = vld [vmem:[%s1 + $0x18] sm:$0xff]
    %v21 = vld [vmem:[%s1 + $0x20] sm:$0xff]
    %v22 = vld [vmem:[%s1 + $0x28] sm:$0xff]
    %v23 = vld [vmem:[%s1 + $0x30] sm:$0xff]
    %v24 = vld [vmem:[%s1 + $0x38] sm:$0xff]
    %v25 = vld [vmem:[%s1 + $0x40] sm:$0xff]
    %v26 = vld [vmem:[%s1 + $0x48] sm:$0xff]
    %v27 = vld [vmem:[%s1 + $0x50] sm:$0xff]
    %v28 = vld [vmem:[%s1 + $0x58] sm:$0xff]
    %v29 = vld [vmem:[%s1 + $0x60] sm:$0xff]
    %v30 = vld [vmem:[%s1 + $0x68] sm:$0xff]
    %v31 = vld [vmem:[%s1 + $0x70] sm:$0xff]
    %v32 = vld [vmem:[%s1 + $0x78] sm:$0xff]
    %v33 = vld [vmem:[%s1 + $0x80] sm:$0xff]
    %v34 = vld [vmem:[%s1 + $0x88] sm:$0xff]
    %v35 = vld [vmem:[%s1 + $0x90] sm:$0xff]
    %v36 = vld [vmem:[%s1 + $0x98] sm:$0xff]
    %v37 = vld [vmem:[%s1 + $0xa0] sm:$0xff]
    %v38 = vld [vmem:[%s1 + $0xa8] sm:$0xff]
    %v39 = vld [vmem:[%s1 + $0xb0] sm:$0xff]
    %v40 = vld [vmem:[%s1 + $0xb8] sm:$0xff]
    %v41 = vld [vmem:[%s1 + $0xc0] sm:$0xff]
    %v42 = vld [vmem:[%s1 + $0xc8] sm:$0xff]
    %v43 = vld [vmem:[%s1 + $0xd0] sm:$0xff]
    %v44 = vld [vmem:[%s1 + $0xd8] sm:$0xff]
    %v45 = vld [vmem:[%s1 + $0xe0] sm:$0xff]
    %v46 = vld [vmem:[%s1 + $0xe8] sm:$0xff]
    %v47 = vld [vmem:[%s1 + $0xf0] sm:$0xff]
    %v48 = vld [vmem:[%s1 + $0xf8] sm:$0xff]
    %v49 = vld [vmem:[%s2] sm:$0x1]
    %v51 = vlaneseq
    %v52 = vshrl.u32 %v51, 7
    %v53 = vsub.s32 0, %v52
    %v54 = vrot.slane %v49, %v53
    %56 = vmatprep.subr.mxu0 0.0
    %57 = vmatpush1.msra.mxu0 %v17
    %58 = vmatprep.subr.mxu0 0.0
    %59 = vmatpush1.msra.mxu0 %v18
    %60 = vmatprep.subr.mxu0 0.0
    %61 = vmatpush1.msra.mxu0 %v19
    %62 = vmatprep.subr.mxu0 0.0
    %63 = vmatpush1.msra.mxu0 %v20
    %64 = vmatprep.subr.mxu0 0.0
    %65 = vmatpush1.msra.mxu0 %v21
    %66 = vmatprep.subr.mxu0 0.0
    %67 = vmatpush1.msra.mxu0 %v22
    %68 = vmatprep.subr.mxu0 0.0
    %69 = vmatpush1.msra.mxu0 %v23
    %70 = vmatprep.subr.mxu0 0.0
    %71 = vmatpush1.msra.mxu0 %v24
    %72 = vmatprep.subr.mxu0 0.0
    %73 = vmatpush1.msra.mxu0 %v25
    %74 = vmatprep.subr.mxu0 0.0
    %75 = vmatpush1.msra.mxu0 %v26
    %76 = vmatprep.subr.mxu0 0.0
    %77 = vmatpush1.msra.mxu0 %v27
    %78 = vmatprep.subr.mxu0 0.0
    %79 = vmatpush1.msra.mxu0 %v28
    %80 = vmatprep.subr.mxu0 0.0
    %81 = vmatpush1.msra.mxu0 %v29
    %82 = vmatprep.subr.mxu0 0.0
    %83 = vmatpush1.msra.mxu0 %v30
    %84 = vmatprep.subr.mxu0 0.0
    %85 = vmatpush1.msra.mxu0 %v31
    %86 = vmatprep.subr.mxu0 0.0
    %87 = vmatpush1.msra.mxu0 %v32
    %88 = vmatprep.subr.mxu0 0.0
    %89 = vmatpush1.msra.mxu0 %v33
    %90 = vmatprep.subr.mxu0 0.0
    %91 = vmatpush1.msra.mxu0 %v34
    %92 = vmatprep.subr.mxu0 0.0
    %93 = vmatpush1.msra.mxu0 %v35
    %94 = vmatprep.subr.mxu0 0.0
    %95 = vmatpush1.msra.mxu0 %v36
    %96 = vmatprep.subr.mxu0 0.0
    %97 = vmatpush1.msra.mxu0 %v37
    %98 = vmatprep.subr.mxu0 0.0
    %99 = vmatpush1.msra.mxu0 %v38
    %100 = vmatprep.subr.mxu0 0.0
    %101 = vmatpush1.msra.mxu0 %v39
    %102 = vmatprep.subr.mxu0 0.0
    %103 = vmatpush1.msra.mxu0 %v40
    %104 = vmatprep.subr.mxu0 0.0
    %105 = vmatpush1.msra.mxu0 %v41
    %106 = vmatprep.subr.mxu0 0.0
    %107 = vmatpush1.msra.mxu0 %v42
    %108 = vmatprep.subr.mxu0 0.0
    %109 = vmatpush1.msra.mxu0 %v43
    %110 = vmatprep.subr.mxu0 0.0
    %111 = vmatpush1.msra.mxu0 %v44
    %112 = vmatprep.subr.mxu0 0.0
    %113 = vmatpush1.msra.mxu0 %v45
    %114 = vmatprep.subr.mxu0 0.0
    %115 = vmatpush1.msra.mxu0 %v46
    %116 = vmatprep.subr.mxu0 0.0
    %117 = vmatpush1.msra.mxu0 %v47
    %118 = vmatprep.subr.mxu0 0.0
    %119 = vmatpush1.msra.mxu0 %v48
    %120 = vmatprep.mubr.f32.mxu0 %v16
    %121 = vmatmul.mubr.f32.gmra.mrb[0].mxu0 %v15
    %v122 = vpop.f32.mrb[0].mxu0
    %v123 = vadd.f32 %v54, %v122
    %v124 = vpop.f32.mrb[0].mxu0
    %125 = vdwg.mxu0
    %126 = vst [vmem:[#allocation2] sm:$0xff] %v123
    // Predicated region
    $region14: #{patch_embed.1} parent=1 // pred_check
      _
    $region15: #{patch_embed.1} parent=1 // pred_check_branch
      %128 = sbr.rel (0) target = $region17
    $region16: #{patch_embed.1} parent=1 // pred_region
      %s130 = ssub.s32 128, 128
      %131 = vsyncadd [#allocation3], %s130
      %s133 = sshll.u32 [#allocation2], 4
      %s134 = int_to_ptr.vmem [resolvable:$true] %s133
      %136 = dma.vmem_to_hbm [thread:$0]  %s134, 128, %s3, [#allocation3]
    $region17: #{patch_embed.1} parent=1 // pred_fallthru
      _
    // Predicated region
    $region18: #{patch_embed.1} parent=1 // pred_check
      _
    $region19: #{patch_embed.1} parent=1 // pred_check_branch
      %138 = sbr.rel (0) target = $region21
    $region20: #{patch_embed.1} parent=1 // pred_region
      %139 = dma.done [#allocation3], 128
    $region21: #{patch_embed.1} parent=1 // pred_fallthru
      _
    %140 = vsyncpa [#allocation3], 1

</llo_original>
